<compile_context>
chip_gen: v7x
topology: tpu7x:2x2x1
jax: 0.10.0
libtpu: 0.0.40
codegen_flags: <defaults>
</compile_context>

<pallas_src>
import functools

import jax
import jax.numpy as jnp
from jax.experimental import pallas as pl
from jax.experimental.pallas import tpu as pltpu

SUBLANE = 8  # batch rows sit on the sublane axis in this layout


def _round_up(n, m):
    return ((n + m - 1) // m) * m


def fc_simple_kernel(x_ref, w1t_ref, b1_ref, w2t_ref, b2_ref, o_ref, *,
                     compute_dtype):
    """One batch tile, natural batch-major layout.

    x_ref  : (TB, in_f)       w1t_ref: (in_f, hidden)   b1_ref: (1, hidden)
    w2t_ref: (hidden, out_c)  b2_ref : (1, out_c)       o_ref : (TB, out_c)
    """
    x = x_ref[...].astype(jnp.float32)
    w1t = w1t_ref[...]
    in_f = w1t.shape[0]

    # fc1: K == in_f (== 2) is far too small for the MXU -> VPU broadcast FMAs
    # (outer-product accumulation), static tiny trip count.
    h = x[:, 0:1] * w1t[0:1, :]                       # (TB,1)*(1,H) -> (TB,H)
    for k in range(1, in_f):
        h = h + x[:, k:k + 1] * w1t[k:k + 1, :]
    h = h + b1_ref[...]

    # Tanh on the EUP.  compute_dtype=bf16 doubles the EUP rate on v6e/v7x.
    h = jnp.tanh(h.astype(compute_dtype))

    # fc2 on the MXU, f32 accumulation.
    out = jnp.dot(h, w2t_ref[...].astype(compute_dtype),
                  preferred_element_type=jnp.float32)
    out = out + b2_ref[...]
    o_ref[...] = out.astype(o_ref.dtype)


def fc_simple_forward(x, w1, b1, w2, b2, *, block_b=4096,
                      compute_dtype=jnp.float32):
    """Forward pass of FC_simple.

    x  : (B, ...)                flattened to (B, in_features)   [Flatten]
    w1 : (hidden, in_features)   PyTorch-native (out, in) layout
    b1 : (hidden,)
    w2 : (out_channels, hidden)
    b2 : (out_channels,)
    returns (B, out_channels)  ==  tanh(x @ w1.T + b1) @ w2.T + b2
    """
    B = x.shape[0]
    x2 = x.reshape(B, -1)                      # Flatten (free for contiguous x)
    in_f = x2.shape[1]
    hidden = w1.shape[0]
    out_c = w2.shape[0]
    assert w1.shape == (hidden, in_f) and w2.shape == (out_c, hidden)

    # Tiny one-time layout fixes on the parameters (40/100/20/5 elements).
    w1t = w1.T                                 # (in_f, hidden)
    w2t = w2.T                                 # (hidden, out_c)
    b1r = b1.reshape(1, hidden)
    b2r = b2.reshape(1, out_c)

    # Batch tile: multiple of 8 (sublane axis).  Big enough to amortize the
    # ~0.35us per-grid-step cost, small enough that the 128-lane-padded VMEM
    # buffers stay well inside the scoped limit.  If the whole (large) batch
    # fits one tile, split it so the "parallel" axis has >= 2 steps (v7x
    # megacore sharding).
    block_b = max(SUBLANE, (int(block_b) // SUBLANE) * SUBLANE)
    tb = min(block_b, _round_up(B, SUBLANE))
    if tb >= B and B >= 2048:
        tb = _round_up(pl.cdiv(B, 2), SUBLANE)
    grid = (pl.cdiv(B, tb),)

    kernel = functools.partial(fc_simple_kernel, compute_dtype=compute_dtype)

    cost = pl.CostEstimate(
        flops=2 * B * (in_f * hidden + hidden * out_c),
        transcendentals=B * hidden,
        bytes_accessed=4 * B * (in_f + out_c)
        + 4 * (in_f * hidden + hidden + hidden * out_c + out_c),
    )

    return pl.pallas_call(
        kernel,
        out_shape=jax.ShapeDtypeStruct((B, out_c), x2.dtype),
        grid=grid,
        in_specs=[
            pl.BlockSpec((tb, in_f), lambda i: (i, 0)),       # x: tiled over batch
            pl.BlockSpec((in_f, hidden), lambda i: (0, 0)),   # weights / biases use
            pl.BlockSpec((1, hidden), lambda i: (0, 0)),      #   constant index_maps
            pl.BlockSpec((hidden, out_c), lambda i: (0, 0)),  #   -> VMEM-resident
            pl.BlockSpec((1, out_c), lambda i: (0, 0)),       #   across grid steps
        ],
        out_specs=pl.BlockSpec((tb, out_c), lambda i: (i, 0)),
        compiler_params=pltpu.CompilerParams(
            dimension_semantics=("parallel",),                # megacore on v7x
            vmem_limit_bytes=32 * 1024 * 1024,
        ),
        cost_estimate=cost,
    )(x2, w1t, b1r, w2t, b2r)


def init_params(key, in_features=2, hidden=20, output_channels=5):
    """Deterministic init mimicking nn.Linear's uniform(-1/sqrt(fan_in), +)."""
    k1, k2, k3, k4 = jax.random.split(key, 4)
    bound1 = 1.0 / jnp.sqrt(in_features)
    bound2 = 1.0 / jnp.sqrt(hidden)
    w1 = jax.random.uniform(k1, (hidden, in_features), jnp.float32, -bound1, bound1)
    b1 = jax.random.uniform(k2, (hidden,), jnp.float32, -bound1, bound1)
    w2 = jax.random.uniform(k3, (output_channels, hidden), jnp.float32, -bound2, bound2)
    b2 = jax.random.uniform(k4, (output_channels,), jnp.float32, -bound2, bound2)
    return w1, b1, w2, b2


def reference_forward(x, w1, b1, w2, b2):
    x2 = x.reshape(x.shape[0], -1)
    h = jnp.tanh(x2 @ w1.T + b1)
    return h @ w2.T + b2


if __name__ == "__main__":
    key = jax.random.PRNGKey(0)
    kx, kp = jax.random.split(key)

    in_features = 2            # FC_simple.expected_input_size
    hidden = 20
    output_channels = 5

    w1, b1, w2, b2 = init_params(kp, in_features, hidden, output_channels)

    # Small batch consistent with the module spec.
    batch = 8
    x = jax.random.normal(kx, (batch, in_features), dtype=jnp.float32)
    out = jax.block_until_ready(fc_simple_forward(x, w1, b1, w2, b2))
    ref = reference_forward(x, w1, b1, w2, b2)
    assert out.shape == (batch, output_channels)
    assert jnp.allclose(out, ref, atol=1e-5, rtol=1e-5)

    # Non-multiple-of-8 batch with a small tile: exercises the multi-step grid,
    # the ragged (unpadded) final block, and constant-index weight residency.
    batch2 = 300
    x_big = jax.random.normal(jax.random.PRNGKey(1), (batch2, in_features),
                              dtype=jnp.float32)
    out2 = jax.block_until_ready(
        fc_simple_forward(x_big, w1, b1, w2, b2, block_b=128))
    ref2 = reference_forward(x_big, w1, b1, w2, b2)
    assert out2.shape == (batch2, output_channels)
    assert jnp.allclose(out2, ref2, atol=1e-5, rtol=1e-5)

    print("KERNEL_OK")
</pallas_src>

<mosaic_0001>
module attributes {stable_mosaic.version = 11 : i64} {
  func.func @fc_simple_kernel(%arg0: i32, %arg1: memref<8x2xf32, #tpu.memory_space<vmem>>, %arg2: memref<2x20xf32, #tpu.memory_space<vmem>>, %arg3: memref<1x20xf32, #tpu.memory_space<vmem>>, %arg4: memref<20x5xf32, #tpu.memory_space<vmem>>, %arg5: memref<1x5xf32, #tpu.memory_space<vmem>>, %arg6: memref<8x5xf32, #tpu.memory_space<vmem>>) attributes {dimension_semantics = [#tpu.dimension_semantics<parallel>], iteration_bounds = array<i64: 1>, scalar_prefetch = 0 : i64, scratch_operands = 0 : i64, tpu.core_type = #tpu.core_type<tc>, window_params = [{transform_indices = @transform_0, window_bounds = array<i64: 8, 2>}, {pipeline_mode = #tpu.pipeline_mode<synchronous>, transform_indices = @transform_1, window_bounds = array<i64: 2, 20>}, {pipeline_mode = #tpu.pipeline_mode<synchronous>, transform_indices = @transform_2, window_bounds = array<i64: 1, 20>}, {pipeline_mode = #tpu.pipeline_mode<synchronous>, transform_indices = @transform_3, window_bounds = array<i64: 20, 5>}, {pipeline_mode = #tpu.pipeline_mode<synchronous>, transform_indices = @transform_4, window_bounds = array<i64: 1, 5>}, {transform_indices = @transform_5, window_bounds = array<i64: 8, 5>}]} {
    %c0 = arith.constant 0 : index
    %c0_0 = arith.constant 0 : index
    %0 = vector.load %arg1[%c0, %c0_0] : memref<8x2xf32, #tpu.memory_space<vmem>>, vector<8x2xf32>
    %c0_1 = arith.constant 0 : index
    %c0_2 = arith.constant 0 : index
    %1 = vector.load %arg2[%c0_1, %c0_2] : memref<2x20xf32, #tpu.memory_space<vmem>>, vector<2x20xf32>
    %2 = vector.extract_strided_slice %0 {offsets = [0, 0], sizes = [8, 1], strides = [1, 1]} : vector<8x2xf32> to vector<8x1xf32>
    %3 = vector.extract_strided_slice %1 {offsets = [0, 0], sizes = [1, 20], strides = [1, 1]} : vector<2x20xf32> to vector<1x20xf32>
    %4 = vector.broadcast %2 : vector<8x1xf32> to vector<8x20xf32>
    %5 = vector.broadcast %3 : vector<1x20xf32> to vector<8x20xf32>
    %6 = arith.mulf %4, %5 : vector<8x20xf32>
    %7 = vector.extract_strided_slice %0 {offsets = [0, 1], sizes = [8, 1], strides = [1, 1]} : vector<8x2xf32> to vector<8x1xf32>
    %8 = vector.extract_strided_slice %1 {offsets = [1, 0], sizes = [1, 20], strides = [1, 1]} : vector<2x20xf32> to vector<1x20xf32>
    %9 = vector.broadcast %7 : vector<8x1xf32> to vector<8x20xf32>
    %10 = vector.broadcast %8 : vector<1x20xf32> to vector<8x20xf32>
    %11 = arith.mulf %9, %10 : vector<8x20xf32>
    %12 = arith.addf %6, %11 : vector<8x20xf32>
    %c0_3 = arith.constant 0 : index
    %c0_4 = arith.constant 0 : index
    %13 = vector.load %arg3[%c0_3, %c0_4] : memref<1x20xf32, #tpu.memory_space<vmem>>, vector<1x20xf32>
    %14 = vector.broadcast %13 : vector<1x20xf32> to vector<8x20xf32>
    %15 = arith.addf %12, %14 : vector<8x20xf32>
    %16 = math.tanh %15 : vector<8x20xf32>
    %c0_5 = arith.constant 0 : index
    %c0_6 = arith.constant 0 : index
    %17 = vector.load %arg4[%c0_5, %c0_6] : memref<20x5xf32, #tpu.memory_space<vmem>>, vector<20x5xf32>
    %cst = arith.constant dense<0.000000e+00> : vector<8x5xf32>
    %18 = tpu.matmul %16, %17, %cst {dimension_numbers = #tpu.dot_dimension_numbers<[1], [0], [0], [1], [0, 0, 1, 1], [], []>} : vector<8x20xf32>, vector<20x5xf32>, vector<8x5xf32> -> vector<8x5xf32>
    %c0_7 = arith.constant 0 : index
    %c0_8 = arith.constant 0 : index
    %19 = vector.load %arg5[%c0_7, %c0_8] : memref<1x5xf32, #tpu.memory_space<vmem>>, vector<1x5xf32>
    %20 = vector.broadcast %19 : vector<1x5xf32> to vector<8x5xf32>
    %21 = arith.addf %18, %20 : vector<8x5xf32>
    %c0_9 = arith.constant 0 : index
    %c0_10 = arith.constant 0 : index
    %22 = vector.load %arg6[%c0_9, %c0_10] : memref<8x5xf32, #tpu.memory_space<vmem>>, vector<8x5xf32>
    tpu.vector_store %arg6[%c0_9, %c0_10], %21 {strides = array<i32>} : memref<8x5xf32, #tpu.memory_space<vmem>>, vector<8x5xf32>,
    return
  }
  func.func @transform_0(%arg0: i32) -> (i32, i32) {
    %c0_i32 = arith.constant 0 : i32
    %c0_i32_0 = arith.constant 0 : i32
    return %arg0, %c0_i32 : i32, i32
  }
  func.func @transform_1(%arg0: i32) -> (i32, i32) {
    %c0_i32 = arith.constant 0 : i32
    %c0_i32_0 = arith.constant 0 : i32
    %c0_i32_1 = arith.constant 0 : i32
    return %c0_i32, %c0_i32_0 : i32, i32
  }
  func.func @transform_2(%arg0: i32) -> (i32, i32) {
    %c0_i32 = arith.constant 0 : i32
    %c0_i32_0 = arith.constant 0 : i32
    %c0_i32_1 = arith.constant 0 : i32
    return %c0_i32, %c0_i32_0 : i32, i32
  }
  func.func @transform_3(%arg0: i32) -> (i32, i32) {
    %c0_i32 = arith.constant 0 : i32
    %c0_i32_0 = arith.constant 0 : i32
    %c0_i32_1 = arith.constant 0 : i32
    return %c0_i32, %c0_i32_0 : i32, i32
  }
  func.func @transform_4(%arg0: i32) -> (i32, i32) {
    %c0_i32 = arith.constant 0 : i32
    %c0_i32_0 = arith.constant 0 : i32
    %c0_i32_1 = arith.constant 0 : i32
    return %c0_i32, %c0_i32_0 : i32, i32
  }
  func.func @transform_5(%arg0: i32) -> (i32, i32) {
    %c0_i32 = arith.constant 0 : i32
    %c0_i32_0 = arith.constant 0 : i32
    return %arg0, %c0_i32 : i32, i32
  }
}

</mosaic_0001>

<llo_original>
// kernel: tpu_custom_call.1
$region0: #{tpu_custom_call.1}
  #allocation0 [shape = 'u32[]', space=smem, size = 0x4, offset = 0x4, fixed_abs, tag = 'smem constant byte address 0x4 - core index']
  #allocation1 [shape = 'u32[144,128]{1,0:T(1,128)}', space=vmem, size = 0x12000, scoped, tag = 'internal scratch']
  %s0 = inlined_call_operand.vmem [shape: f32[8,2], index: 0, kind: input, shape index: {}]
  %s1 = inlined_call_operand.vmem [shape: f32[2,20], index: 1, kind: input, shape index: {}]
  %s2 = inlined_call_operand.vmem [shape: f32[1,20], index: 2, kind: input, shape index: {}]
  %s3 = inlined_call_operand.vmem [shape: f32[20,5], index: 3, kind: input, shape index: {}]
  %s4 = inlined_call_operand.vmem [shape: f32[1,5], index: 4, kind: input, shape index: {}]
  %s5 = inlined_call_operand.hbm [shape: f32[8,5], index: 5, kind: output, shape index: {}]
  %s6 = sld [smem:[#allocation0]]
  $region30: #{tpu_custom_call.1} parent=0
    _
  %s8 = ssub.s32 1, %s6
  %s9 = scalar_select 0, %s8, %s6
  $region1: #{tpu_custom_call.1} parent=0
    #allocation2 [shape = 'u8[4096]{0}', space=vmem, size = 0x1000, scoped, tag = 'output window, operand 0, single buffered']
    #allocation3 [shape = 's32[1]{0}', space=sflag, size = 0x4, scoped, tag = 'scoped memory for tpu_custom_call.1']
    %10 = vsyncpa [#allocation3], 0
    // Predicated region
    $region2: #{tpu_custom_call.1} parent=1 // pred_check
      _
    $region3: #{tpu_custom_call.1} parent=1 // pred_check_branch
      %12 = sbr.rel (0) target = $region5
    $region4: #{tpu_custom_call.1} parent=1 // pred_region
      _
    $region5: #{tpu_custom_call.1} parent=1 // pred_fallthru
      _
    // Predicated region
    $region6: #{tpu_custom_call.1} parent=1 // pred_check
      _
    $region7: #{tpu_custom_call.1} parent=1 // pred_check_branch
      %14 = sbr.rel (0) target = $region9
    $region8: #{tpu_custom_call.1} parent=1 // pred_region
      _
    $region9: #{tpu_custom_call.1} parent=1 // pred_fallthru
      _
    // Predicated region
    $region10: #{tpu_custom_call.1} parent=1 // pred_check
      _
    $region11: #{tpu_custom_call.1} parent=1 // pred_check_branch
      %16 = sbr.rel (0) target = $region13
    $region12: #{tpu_custom_call.1} parent=1 // pred_region
      _
    $region13: #{tpu_custom_call.1} parent=1 // pred_fallthru
      _
    // Predicated region
    $region14: #{tpu_custom_call.1} parent=1 // pred_check
      _
    $region15: #{tpu_custom_call.1} parent=1 // pred_check_branch
      %18 = sbr.rel (0) target = $region17
    $region16: #{tpu_custom_call.1} parent=1 // pred_region
      _
    $region17: #{tpu_custom_call.1} parent=1 // pred_fallthru
      _
    // Predicated region
    $region18: #{tpu_custom_call.1} parent=1 // pred_check
      _
    $region19: #{tpu_custom_call.1} parent=1 // pred_check_branch
      %20 = sbr.rel (0) target = $region21
    $region20: #{tpu_custom_call.1} parent=1 // pred_region
      _
    $region21: #{tpu_custom_call.1} parent=1 // pred_fallthru
      _
    %v21 = vld [vmem:[%s0] sm:$0xff]
    %v22 = vld [vmem:[%s1] sm:$0x3]
    %24 = vset.pattern.permute.xlu0 0
    %25 = vperm.xlu0 %24, %v21
    %v26 = vpop.permute.xlu0 %25
    %v28 = vlaneseq
    %v29 = vshrl.u32 %v28, 7
    %v30 = vsub.s32 0, %v29
    %v31 = vrot.slane %v22, %v30
    %v32 = vmul.f32 %v26, %v31
    %33 = vset.pattern.permute.xlu0 1
    %34 = vperm.xlu0 %33, %v21
    %v35 = vpop.permute.xlu0 %34
    %v37 = vlaneseq
    %v38 = vshrl.u32 %v37, 7
    %v39 = vsub.s32 1, %v38
    %v40 = vrot.slane %v22, %v39
    %v41 = vmul.f32 %v35, %v40
    %v42 = vadd.f32 %v32, %v41
    %v43 = vld [vmem:[%s2] sm:$0x1]
    %v45 = vlaneseq
    %v46 = vshrl.u32 %v45, 7
    %v47 = vsub.s32 0, %v46
    %v48 = vrot.slane %v43, %v47
    %v50 = vadd.f32 %v42, %v48
    %v51 = vtanh.pop %v50
    %v52 = vld [vmem:[%s3] sm:$0xff]
    %v53 = vld [vmem:[%s3 + $0x8] sm:$0xff]
    %v54 = vld [vmem:[%s3 + $0x10] sm:$0xf]
    %v55 = vld [vmem:[%s4] sm:$0x1]
    %v57 = vlaneseq
    %v58 = vshrl.u32 %v57, 7
    %v59 = vsub.s32 0, %v58
    %v60 = vrot.slane %v55, %v59
    %vm62 = vcmask 162816
    %v64 = vsel %vm62, %v51, 0
    %vm66 = vcmask 1043456
    %v68 = vsel %vm66, %v54, 0
    %70 = vmatprep.subr.mxu0 0.0
    %71 = vmatpush1.msra.mxu0 %v52
    %72 = vmatprep.subr.mxu0 0.0
    %73 = vmatpush1.msra.mxu0 %v53
    %74 = vmatprep.subr.mxu0 0.0
    %75 = vmatpush1.msra.mxu0 %v68
    %76 = vmatprep.subr.mxu0 0.0
    %77 = vmatpush1.msra.mxu0 0.0
    %78 = vmatprep.subr.mxu0 0.0
    %79 = vmatpush1.msra.mxu0 0.0
    %80 = vmatprep.subr.mxu0 0.0
    %81 = vmatpush1.msra.mxu0 0.0
    %82 = vmatprep.subr.mxu0 0.0
    %83 = vmatpush1.msra.mxu0 0.0
    %84 = vmatprep.subr.mxu0 0.0
    %85 = vmatpush1.msra.mxu0 0.0
    %86 = vmatprep.subr.mxu0 0.0
    %87 = vmatpush1.msra.mxu0 0.0
    %88 = vmatprep.subr.mxu0 0.0
    %89 = vmatpush1.msra.mxu0 0.0
    %90 = vmatprep.subr.mxu0 0.0
    %91 = vmatpush1.msra.mxu0 0.0
    %92 = vmatprep.subr.mxu0 0.0
    %93 = vmatpush1.msra.mxu0 0.0
    %94 = vmatprep.subr.mxu0 0.0
    %95 = vmatpush1.msra.mxu0 0.0
    %96 = vmatprep.subr.mxu0 0.0
    %97 = vmatpush1.msra.mxu0 0.0
    %98 = vmatprep.subr.mxu0 0.0
    %99 = vmatpush1.msra.mxu0 0.0
    %100 = vmatprep.subr.mxu0 0.0
    %101 = vmatpush1.msra.mxu0 0.0
    %102 = vmatprep.subr.mxu0 0.0
    %103 = vmatpush1.msra.mxu0 0.0
    %104 = vmatprep.subr.mxu0 0.0
    %105 = vmatpush1.msra.mxu0 0.0
    %106 = vmatprep.subr.mxu0 0.0
    %107 = vmatpush1.msra.mxu0 0.0
    %108 = vmatprep.subr.mxu0 0.0
    %109 = vmatpush1.msra.mxu0 0.0
    %110 = vmatprep.subr.mxu0 0.0
    %111 = vmatpush1.msra.mxu0 0.0
    %112 = vmatprep.subr.mxu0 0.0
    %113 = vmatpush1.msra.mxu0 0.0
    %114 = vmatprep.subr.mxu0 0.0
    %115 = vmatpush1.msra.mxu0 0.0
    %116 = vmatprep.subr.mxu0 0.0
    %117 = vmatpush1.msra.mxu0 0.0
    %118 = vmatprep.subr.mxu0 0.0
    %119 = vmatpush1.msra.mxu0 0.0
    %120 = vmatprep.subr.mxu0 0.0
    %121 = vmatpush1.msra.mxu0 0.0
    %122 = vmatprep.subr.mxu0 0.0
    %123 = vmatpush1.msra.mxu0 0.0
    %124 = vmatprep.subr.mxu0 0.0
    %125 = vmatpush1.msra.mxu0 0.0
    %126 = vmatprep.subr.mxu0 0.0
    %127 = vmatpush1.msra.mxu0 0.0
    %128 = vmatprep.subr.mxu0 0.0
    %129 = vmatpush1.msra.mxu0 0.0
    %130 = vmatprep.subr.mxu0 0.0
    %131 = vmatpush1.msra.mxu0 0.0
    %132 = vmatprep.subr.mxu0 0.0
    %133 = vmatpush1.msra.mxu0 0.0
    %134 = vmatprep.mubr.f32.mxu0 0.0
    %135 = vmatmul.mubr.f32.gmra.mrb[0].mxu0 %v64
    %v136 = vpop.f32.mrb[0].mxu0
    %v137 = vadd.f32 %v60, %v136
    %v138 = vpop.f32.mrb[0].mxu0
    %139 = vdwg.mxu0
    %vm140 = vcmask 39936
    %141 = vst.msk [vmem:[#allocation2] sm:$0xff] %vm140, %v137
    // Predicated region
    $region22: #{tpu_custom_call.1} parent=1 // pred_check
      _
    $region23: #{tpu_custom_call.1} parent=1 // pred_check_branch
      %143 = sbr.rel (0) target = $region25
    $region24: #{tpu_custom_call.1} parent=1 // pred_region
      %s145 = ssub.s32 128, 128
      %146 = vsyncadd [#allocation3], %s145
      %s148 = sshll.u32 [#allocation2], 4
      %s149 = int_to_ptr.vmem [resolvable:$true] %s148
      %151 = dma.vmem_to_hbm [thread:$0]  %s149, 128, %s5, [#allocation3]
    $region25: #{tpu_custom_call.1} parent=1 // pred_fallthru
      _
    // Predicated region
    $region26: #{tpu_custom_call.1} parent=1 // pred_check
      _
    $region27: #{tpu_custom_call.1} parent=1 // pred_check_branch
      %153 = sbr.rel (0) target = $region29
    $region28: #{tpu_custom_call.1} parent=1 // pred_region
      %154 = dma.done [#allocation3], 128
    $region29: #{tpu_custom_call.1} parent=1 // pred_fallthru
      _
    %155 = vsyncpa [#allocation3], 1

</llo_original>
